<compile_context>
chip_gen: v7x
topology: tpu7x:2x2x1
jax: 0.10.0
libtpu: 0.0.40
codegen_flags: <defaults>
</compile_context>

<pallas_src>
import math

import jax
import jax.numpy as jnp
from jax.experimental import pallas as pl
from jax.experimental.pallas import tpu as pltpu


def _copy_kernel(x_ref, o_ref):
    # Pure lane-dense vld/vst copy of one tile.
    o_ref[...] = x_ref[...]


def _sublane_pack(dtype) -> int:
    """Rows per packed vreg sublane group for this dtype."""
    return {4: 8, 2: 16, 1: 32}.get(jnp.dtype(dtype).itemsize, 8)


def _largest_aligned_divisor(full: int, align: int, cap: int) -> int:
    """Largest multiple of `align` that divides `full` and is <= cap (0 if none)."""
    t = min(cap, full) // align * align
    while t >= align:
        if full % t == 0:
            return t
        t -= align
    return 0


def _choose_slab(total: int, sub_pack: int, lane_target: int = 2048):
    """Collapse `total` contiguous elements into a (rows, C) slab.

    C is a multiple of 128 (capped at lane_target) that divides total; rows is
    preferably a multiple of sub_pack (full vreg occupancy).  Returns None when
    total is not a multiple of 128 (caller falls back to the (b, flat) view).
    """
    if total < 128 or total % 128 != 0:
        return None
    best = 0
    for c in range(128, min(lane_target, total) + 1, 128):
        if total % c == 0 and (total // c) % sub_pack == 0:
            best = c
    if best == 0:
        for c in range(128, min(lane_target, total) + 1, 128):
            if total % c == 0:
                best = c
    if best == 0:
        return None
    return total // best, best


def _pallas_copy_2d(a: jax.Array, sub_pack: int,
                    lane_target: int = 2048,
                    tile_bytes: int = 2 * 1024 * 1024) -> jax.Array:
    """Copy a 2-D array HBM->HBM through a lane-dense tiled Pallas kernel."""
    rows, cols = a.shape
    itemsize = jnp.dtype(a.dtype).itemsize

    # Lane (last-dim) tile: full dim when small, else a multiple of 128.  A
    # non-dividing tile is still legal -- the pl.cdiv grid masks the edge tile.
    if cols <= lane_target:
        tc = cols
    else:
        tc = _largest_aligned_divisor(cols, 128, lane_target) or (lane_target // 128) * 128

    # Sublane (first-dim) tile, sized so one tile stays under `tile_bytes`
    # (in + out, double-buffered => ~4x tile of scoped VMEM on every gen).
    budget_rows = max(sub_pack, tile_bytes // max(1, tc * itemsize) // sub_pack * sub_pack)
    if rows <= budget_rows:
        tr = rows
    else:
        tr = _largest_aligned_divisor(rows, sub_pack, budget_rows) or budget_rows

    grid = (pl.cdiv(rows, tr), pl.cdiv(cols, tc))

    return pl.pallas_call(
        _copy_kernel,
        out_shape=jax.ShapeDtypeStruct((rows, cols), a.dtype),
        grid=grid,
        in_specs=[pl.BlockSpec((tr, tc), lambda i, j: (i, j))],
        out_specs=pl.BlockSpec((tr, tc), lambda i, j: (i, j)),
        compiler_params=pltpu.CompilerParams(
            dimension_semantics=("parallel", "parallel"),
        ),
    )(a)


@jax.jit
def flatten(x: jax.Array) -> jax.Array:
    """Pallas equivalent of torch `x.view(x.size(0), -1)`."""
    b = x.shape[0]
    flat = math.prod(x.shape[1:])  # == 1 for 1-D inputs

    # Free metadata reshape (== torch .view(B, -1)).
    x2 = x.reshape(b, flat)

    sub_pack = _sublane_pack(x.dtype)
    slab = _choose_slab(b * flat, sub_pack)
    if slab is not None:
        rows, cols = slab
        out = _pallas_copy_2d(x2.reshape(rows, cols), sub_pack)  # free reshape
        return out.reshape(b, flat)                              # free reshape
    # Fallback for element counts not divisible by 128: tile the (b, flat)
    # view itself (cdiv grid + masked edge tiles keep the pipeline alive).
    return _pallas_copy_2d(x2, sub_pack)


if __name__ == "__main__":
    key = jax.random.PRNGKey(0)
    # Small NCHW input consistent with the module's usage: (B, C, H, W)
    x = jax.random.normal(key, (2, 4, 16, 16), dtype=jnp.float32)

    out = flatten(x)
    jax.block_until_ready(out)

    # Reference check against plain JAX reshape (== torch .view(B, -1)).
    ref = x.reshape(x.shape[0], -1)
    assert out.shape == (2, 4 * 16 * 16), out.shape
    assert out.dtype == x.dtype
    assert jnp.array_equal(out, ref)

    print("KERNEL_OK")
</pallas_src>

<mosaic_0001>
module attributes {stable_mosaic.version = 11 : i64} {
  func.func @_copy_kernel(%arg0: i32, %arg1: i32, %arg2: memref<8x256xf32, #tpu.memory_space<vmem>>, %arg3: memref<8x256xf32, #tpu.memory_space<vmem>>) attributes {dimension_semantics = [#tpu.dimension_semantics<parallel>, #tpu.dimension_semantics<parallel>], iteration_bounds = array<i64: 1, 1>, scalar_prefetch = 0 : i64, scratch_operands = 0 : i64, tpu.core_type = #tpu.core_type<tc>, window_params = [{transform_indices = @transform_0, window_bounds = array<i64: 8, 256>}, {transform_indices = @transform_1, window_bounds = array<i64: 8, 256>}]} {
    %c0 = arith.constant 0 : index
    %c0_0 = arith.constant 0 : index
    %0 = vector.load %arg2[%c0, %c0_0] : memref<8x256xf32, #tpu.memory_space<vmem>>, vector<8x256xf32>
    %c0_1 = arith.constant 0 : index
    %c0_2 = arith.constant 0 : index
    %1 = vector.load %arg3[%c0_1, %c0_2] : memref<8x256xf32, #tpu.memory_space<vmem>>, vector<8x256xf32>
    tpu.vector_store %arg3[%c0_1, %c0_2], %0 {strides = array<i32>} : memref<8x256xf32, #tpu.memory_space<vmem>>, vector<8x256xf32>,
    return
  }
  func.func @transform_0(%arg0: i32, %arg1: i32) -> (i32, i32) {
    %c0_i32 = arith.constant 0 : i32
    return %arg0, %arg1 : i32, i32
  }
  func.func @transform_1(%arg0: i32, %arg1: i32) -> (i32, i32) {
    %c0_i32 = arith.constant 0 : i32
    return %arg0, %arg1 : i32, i32
  }
}

</mosaic_0001>

<llo_original>
// kernel: flatten.1
$region0: #{flatten.1}
  #allocation0 [shape = 'u32[]', space=smem, size = 0x4, offset = 0x4, fixed_abs, tag = 'smem constant byte address 0x4 - core index']
  #allocation1 [shape = 'u32[144,128]{1,0:T(1,128)}', space=vmem, size = 0x12000, scoped, tag = 'internal scratch']
  %s0 = inlined_call_operand.vmem [shape: f32[8,256], index: 0, kind: input, shape index: {}]
  %s1 = inlined_call_operand.vmem [shape: f32[8,256], index: 1, kind: output, shape index: {}]
  %s2 = sld [smem:[#allocation0]]
  $region14: #{flatten.1} parent=0
    _
  %s4 = ssub.s32 1, %s2
  %s5 = scalar_select 0, %s4, %s2
  // Predicated region
  $region2: #{flatten.1} parent=0 // pred_check
    _
  $region3: #{flatten.1} parent=0 // pred_check_branch
    %7 = sbr.rel (0) target = $region5
  $region4: #{flatten.1} parent=0 // pred_region
    _
  $region5: #{flatten.1} parent=0 // pred_fallthru
    _
  %v8 = vld [vmem:[%s0] sm:$0xff]
  %v9 = vld [vmem:[%s0 + $0x8] sm:$0xff]
  %10 = vst [vmem:[%s1] sm:$0xff] %v8
  %11 = vst [vmem:[%s1 + $0x8] sm:$0xff] %v9
  // Predicated region
  $region6: #{flatten.1} parent=0 // pred_check
    _
  $region7: #{flatten.1} parent=0 // pred_check_branch
    %13 = sbr.rel (0) target = $region9
  $region8: #{flatten.1} parent=0 // pred_region
    _
  $region9: #{flatten.1} parent=0 // pred_fallthru
    _
  // Predicated region
  $region10: #{flatten.1} parent=0 // pred_check
    _
  $region11: #{flatten.1} parent=0 // pred_check_branch
    %15 = sbr.rel (0) target = $region13
  $region12: #{flatten.1} parent=0 // pred_region
    _
  $region13: #{flatten.1} parent=0 // pred_fallthru
    _

</llo_original>
